<compile_context>
chip_gen: v5e
topology: v5e:2x2
jax: 0.10.0
libtpu: 0.0.40
codegen_flags: <defaults>
</compile_context>

<pallas_src>
import jax
import jax.numpy as jnp
from jax import lax
from jax.experimental import pallas as pl
from jax.experimental.pallas import tpu as pltpu

IN_FEATURES = 10
OUT_FEATURES = 2
PACK = 64                         # logical rows folded per lane-dense row
IN_LANES = PACK * IN_FEATURES     # 640  (multiple of 128)
OUT_LANES = PACK * OUT_FEATURES   # 128


def _packed_linear_softmax_kernel(xp_ref, wp_ref, bp_ref, o_ref):
    """Fused Linear(10,2)+Softmax on lane-dense packed blocks.

    xp_ref : (tb, 640) input block (64 logical rows per packed row)
    wp_ref : (640, 128) block-diagonal packed diff-weight (VMEM resident)
    bp_ref : (1, 128)   packed diff-bias (VMEM resident)
    o_ref  : (tb, 128)  [p0, p1] interleaved == flat (B, 2) row-major layout
    """
    x = xp_ref[...].astype(jnp.float32)
    # z[r, 2j+c] = (w1 - w0) . x_logical[64r + j] + (b1 - b0), c in {0,1}
    z = jnp.dot(x, wp_ref[...], preferred_element_type=jnp.float32) + bp_ref[...]
    # 2-class softmax == logistic on the logit difference; stable at both
    # tails (exp overflow -> inf -> reciprocal -> 0).
    p1 = pl.reciprocal(1.0 + jnp.exp(-z), approx=False)
    # Even lanes hold class-0 prob, odd lanes class-1 prob.
    col = lax.broadcasted_iota(jnp.int32, o_ref.shape, dimension=1)
    o_ref[...] = jnp.where(col % 2 == 0, 1.0 - p1, p1).astype(o_ref.dtype)


def _choose_tile(num_packed_rows, block_rows, target_steps):
    """Pick a packed-row tile: multiple of 8 (f32 sublane rule) or the full
    extent for tiny inputs; aim for >= target_steps grid steps."""
    if num_packed_rows <= 8:
        return num_packed_rows
    tb = min(block_rows, max(8, pl.cdiv(num_packed_rows, target_steps)))
    tb = max(8, (tb // 8) * 8)
    return tb


def model_forward(x, weight, bias, *, block_rows=1024, target_steps=4):
    """Forward pass of Model (eval-mode dropout == identity).

    x:      (B, 10) activations (any float dtype; compute is f32).
    weight: (2, 10) torch nn.Linear layout.
    bias:   (2,).
    block_rows: max packed rows per block (1024 -> 2.5 MiB input block).
    """
    B = x.shape[0]
    assert x.shape[1] == IN_FEATURES

    # Pad batch to a multiple of PACK so the lane-dense reshape is legal.
    # When B % PACK == 0 (common case) the reshape below is zero-copy.
    b_pad = pl.cdiv(B, PACK) * PACK
    if b_pad != B:
        x = jnp.pad(x, ((0, b_pad - B), (0, 0)))
    rows = b_pad // PACK
    xp = x.reshape(rows, IN_LANES)                       # (rows, 640)

    # 2-class softmax depends only on the logit difference; build the packed
    # block-diagonal diff-weight once in the wrapper (tiny, outside the grid).
    w_diff = (weight[1, :] - weight[0, :]).astype(jnp.float32)      # (10,)
    b_diff = (bias[1] - bias[0]).astype(jnp.float32)
    blk = jnp.broadcast_to(w_diff[:, None], (IN_FEATURES, OUT_FEATURES))
    wp = jnp.kron(jnp.eye(PACK, dtype=jnp.float32), blk)            # (640, 128)
    bp = jnp.full((1, OUT_LANES), b_diff, jnp.float32)              # (1, 128)

    tb = _choose_tile(rows, block_rows, target_steps)
    grid = (pl.cdiv(rows, tb),)

    out_packed = pl.pallas_call(
        _packed_linear_softmax_kernel,
        out_shape=jax.ShapeDtypeStruct((rows, OUT_LANES), jnp.float32),
        grid=grid,
        in_specs=[
            pl.BlockSpec((tb, IN_LANES), lambda i: (i, 0)),          # streamed
            pl.BlockSpec((IN_LANES, OUT_LANES), lambda i: (0, 0)),   # resident
            pl.BlockSpec((1, OUT_LANES), lambda i: (0, 0)),          # resident
        ],
        out_specs=pl.BlockSpec((tb, OUT_LANES), lambda i: (i, 0)),
        compiler_params=pltpu.CompilerParams(
            dimension_semantics=("parallel",),
        ),
    )(xp, wp, bp)

    out = out_packed.reshape(b_pad, OUT_FEATURES)        # zero-copy reshape
    if b_pad != B:
        out = out[:B]
    return out


def init_params(key):
    # Deterministic init mimicking torch.nn.Linear default:
    # U(-1/sqrt(fan_in), 1/sqrt(fan_in)).
    kw, kb = jax.random.split(key)
    bound = 1.0 / jnp.sqrt(jnp.float32(IN_FEATURES))
    weight = jax.random.uniform(
        kw, (OUT_FEATURES, IN_FEATURES), jnp.float32, -bound, bound)
    bias = jax.random.uniform(
        kb, (OUT_FEATURES,), jnp.float32, -bound, bound)
    return weight, bias


if __name__ == "__main__":
    key = jax.random.PRNGKey(0)
    k_x, k_x2, k_p = jax.random.split(key, 3)
    weight, bias = init_params(k_p)

    # Case 1: small batch, multiple of 64 (zero-copy packing, single block).
    B1 = 256
    x1 = jax.random.normal(k_x, (B1, IN_FEATURES), jnp.float32)
    out1 = jax.block_until_ready(model_forward(x1, weight, bias))
    ref1 = jax.nn.softmax(x1 @ weight.T + bias, axis=-1)
    assert out1.shape == (B1, OUT_FEATURES)
    assert bool(jnp.all(jnp.abs(jnp.sum(out1, axis=-1) - 1.0) < 1e-5))
    assert bool(jnp.max(jnp.abs(out1 - ref1)) < 1e-4)

    # Case 2: ragged batch (padding path) + multi-step pipelined grid.
    B2 = 1000
    x2 = jax.random.normal(k_x2, (B2, IN_FEATURES), jnp.float32)
    out2 = jax.block_until_ready(
        model_forward(x2, weight, bias, block_rows=8, target_steps=2))
    ref2 = jax.nn.softmax(x2 @ weight.T + bias, axis=-1)
    assert out2.shape == (B2, OUT_FEATURES)
    assert bool(jnp.all(jnp.abs(jnp.sum(out2, axis=-1) - 1.0) < 1e-5))
    assert bool(jnp.max(jnp.abs(out2 - ref2)) < 1e-4)

    print("KERNEL_OK")
</pallas_src>

<mosaic_0001>
module attributes {stable_mosaic.version = 11 : i64} {
  func.func @_packed_linear_softmax_kernel(%arg0: i32, %arg1: memref<4x640xf32, #tpu.memory_space<vmem>>, %arg2: memref<640x128xf32, #tpu.memory_space<vmem>>, %arg3: memref<1x128xf32, #tpu.memory_space<vmem>>, %arg4: memref<4x128xf32, #tpu.memory_space<vmem>>) attributes {dimension_semantics = [#tpu.dimension_semantics<parallel>], iteration_bounds = array<i64: 1>, scalar_prefetch = 0 : i64, scratch_operands = 0 : i64, tpu.core_type = #tpu.core_type<tc>, window_params = [{transform_indices = @transform_0, window_bounds = array<i64: 4, 640>}, {pipeline_mode = #tpu.pipeline_mode<synchronous>, transform_indices = @transform_1, window_bounds = array<i64: 640, 128>}, {pipeline_mode = #tpu.pipeline_mode<synchronous>, transform_indices = @transform_2, window_bounds = array<i64: 1, 128>}, {transform_indices = @transform_3, window_bounds = array<i64: 4, 128>}]} {
    %c0 = arith.constant 0 : index
    %c0_0 = arith.constant 0 : index
    %0 = vector.load %arg1[%c0, %c0_0] : memref<4x640xf32, #tpu.memory_space<vmem>>, vector<4x640xf32>
    %c0_1 = arith.constant 0 : index
    %c0_2 = arith.constant 0 : index
    %1 = vector.load %arg2[%c0_1, %c0_2] : memref<640x128xf32, #tpu.memory_space<vmem>>, vector<640x128xf32>
    %cst = arith.constant dense<0.000000e+00> : vector<4x128xf32>
    %2 = tpu.matmul %0, %1, %cst {dimension_numbers = #tpu.dot_dimension_numbers<[1], [0], [0], [1], [0, 0, 1, 1], [], []>} : vector<4x640xf32>, vector<640x128xf32>, vector<4x128xf32> -> vector<4x128xf32>
    %c0_3 = arith.constant 0 : index
    %c0_4 = arith.constant 0 : index
    %3 = vector.load %arg3[%c0_3, %c0_4] : memref<1x128xf32, #tpu.memory_space<vmem>>, vector<1x128xf32>
    %4 = vector.broadcast %3 : vector<1x128xf32> to vector<4x128xf32>
    %5 = arith.addf %2, %4 : vector<4x128xf32>
    %cst_5 = arith.constant 0.000000e+00 : f32
    %6 = vector.broadcast %cst_5 : f32 to vector<4x128xf32>
    %7 = arith.subf %6, %5 : vector<4x128xf32>
    %8 = math.exp %7 : vector<4x128xf32>
    %cst_6 = arith.constant 1.000000e+00 : f32
    %9 = vector.broadcast %cst_6 : f32 to vector<4x128xf32>
    %10 = arith.addf %9, %8 : vector<4x128xf32>
    %11 = tpu.reciprocal %10 : vector<4x128xf32> -> vector<4x128xf32>
    %12 = tpu.iota {dimensions = array<i32: 1>} : vector<4x128xi32>
    %c2_i32 = arith.constant 2 : i32
    %c0_i32 = arith.constant 0 : i32
    %13 = arith.cmpi eq, %c2_i32, %c0_i32 : i32
    %c1_i32 = arith.constant 1 : i32
    %14 = arith.select %13, %c1_i32, %c2_i32 : i32
    %15 = vector.broadcast %14 : i32 to vector<4x128xi32>
    %16 = arith.remsi %12, %15 : vector<4x128xi32>
    %c0_i32_7 = arith.constant 0 : i32
    %17 = vector.broadcast %c0_i32_7 : i32 to vector<4x128xi32>
    %18 = arith.cmpi ne, %16, %17 : vector<4x128xi32>
    %c0_i32_8 = arith.constant 0 : i32
    %19 = vector.broadcast %c0_i32_8 : i32 to vector<4x128xi32>
    %20 = arith.cmpi slt, %16, %19 : vector<4x128xi32>
    %c0_i32_9 = arith.constant 0 : i32
    %21 = arith.cmpi slt, %14, %c0_i32_9 : i32
    %22 = vector.broadcast %21 : i1 to vector<4x128xi1>
    %23 = vector.broadcast %22 : vector<4x128xi1> to vector<4x128xi1>
    %24 = arith.xori %20, %23 : vector<4x128xi1>
    %25 = arith.andi %24, %18 : vector<4x128xi1>
    %26 = vector.broadcast %14 : i32 to vector<4x128xi32>
    %27 = arith.addi %16, %26 : vector<4x128xi32>
    %28 = arith.select %25, %27, %16 : vector<4x128xi1>, vector<4x128xi32>
    %c0_i32_10 = arith.constant 0 : i32
    %29 = vector.broadcast %c0_i32_10 : i32 to vector<4x128xi32>
    %30 = arith.cmpi eq, %28, %29 : vector<4x128xi32>
    %cst_11 = arith.constant 1.000000e+00 : f32
    %31 = vector.broadcast %cst_11 : f32 to vector<4x128xf32>
    %32 = arith.subf %31, %11 : vector<4x128xf32>
    %33 = arith.select %30, %32, %11 : vector<4x128xi1>, vector<4x128xf32>
    %c0_12 = arith.constant 0 : index
    %c0_13 = arith.constant 0 : index
    %34 = vector.load %arg4[%c0_12, %c0_13] : memref<4x128xf32, #tpu.memory_space<vmem>>, vector<4x128xf32>
    tpu.vector_store %arg4[%c0_12, %c0_13], %33 {strides = array<i32>} : memref<4x128xf32, #tpu.memory_space<vmem>>, vector<4x128xf32>,
    return
  }
  func.func @transform_0(%arg0: i32) -> (i32, i32) {
    %c0_i32 = arith.constant 0 : i32
    %c0_i32_0 = arith.constant 0 : i32
    return %arg0, %c0_i32 : i32, i32
  }
  func.func @transform_1(%arg0: i32) -> (i32, i32) {
    %c0_i32 = arith.constant 0 : i32
    %c0_i32_0 = arith.constant 0 : i32
    %c0_i32_1 = arith.constant 0 : i32
    return %c0_i32, %c0_i32_0 : i32, i32
  }
  func.func @transform_2(%arg0: i32) -> (i32, i32) {
    %c0_i32 = arith.constant 0 : i32
    %c0_i32_0 = arith.constant 0 : i32
    %c0_i32_1 = arith.constant 0 : i32
    return %c0_i32, %c0_i32_0 : i32, i32
  }
  func.func @transform_3(%arg0: i32) -> (i32, i32) {
    %c0_i32 = arith.constant 0 : i32
    %c0_i32_0 = arith.constant 0 : i32
    return %arg0, %c0_i32 : i32, i32
  }
}

</mosaic_0001>

<llo_original>
// kernel: tpu_custom_call.1
$region0: #{tpu_custom_call.1}
  #allocation0 [shape = 'u32[]', space=smem, size = 0x4, offset = 0x4, fixed_abs, tag = 'smem constant byte address 0x4 - core index']
  #allocation1 [shape = 'u32[72,128]{1,0:T(1,128)}', space=vmem, size = 0x9000, scoped, tag = 'internal scratch']
  %s0 = inlined_call_operand.hbm [shape: f32[4,640], index: 0, kind: input, shape index: {}]
  %s1 = inlined_call_operand.hbm [shape: f32[640,128], index: 1, kind: input, shape index: {}]
  %s2 = inlined_call_operand.vmem [shape: f32[1,128], index: 2, kind: input, shape index: {}]
  %s3 = inlined_call_operand.hbm [shape: f32[4,128], index: 3, kind: output, shape index: {}]
  %s4 = sld [smem:[#allocation0]]
  $region30: #{tpu_custom_call.1} parent=0
    _
  %s6 = ssub.s32 1, %s4
  %s7 = scalar_select 0, %s6, %s4
  $region1: #{tpu_custom_call.1} parent=0
    #allocation2 [shape = 'u8[10240]{0}', space=vmem, size = 0x2800, scoped, tag = 'input window, operand 0, single buffered']
    #allocation3 [shape = 's32[1]{0}', space=sflag, size = 0x4, scoped, tag = 'scoped memory for tpu_custom_call.1']
    #allocation4 [shape = 's32[1]{0}', space=sflag, size = 0x4, scoped, tag = 'scoped memory for tpu_custom_call.1']
    #allocation5 [shape = 'u8[327680]{0}', space=vmem, size = 0x50000, scoped, tag = 'input window, operand 1, single buffered']
    #allocation6 [shape = 's32[1]{0}', space=sflag, size = 0x4, scoped, tag = 'scoped memory for tpu_custom_call.1']
    #allocation7 [shape = 'u8[2048]{0}', space=vmem, size = 0x800, scoped, tag = 'output window, operand 0, single buffered']
    %8 = vsyncpa [#allocation3], 0
    %9 = vsyncpa [#allocation6], 0
    %10 = vsyncpa [#allocation4], 0
    // Predicated region
    $region2: #{tpu_custom_call.1} parent=1 // pred_check
      _
    $region3: #{tpu_custom_call.1} parent=1 // pred_check_branch
      %12 = sbr.rel (0) target = $region5
    $region4: #{tpu_custom_call.1} parent=1 // pred_region
      %14 = vsyncadd [#allocation3], 0
      %s16 = sshll.u32 %s0, 4
      %s17 = int_to_ptr.hbm [resolvable:$true] %s16
      %s18 = sshll.u32 [#allocation2], 4
      %s19 = int_to_ptr.vmem [resolvable:$true] %s18
      %21 = dma.hbm_to_vmem [thread:$0]  %s17, 320, %s19, [#allocation3]
    $region5: #{tpu_custom_call.1} parent=1 // pred_fallthru
      _
    // Predicated region
    $region6: #{tpu_custom_call.1} parent=1 // pred_check
      _
    $region7: #{tpu_custom_call.1} parent=1 // pred_check_branch
      %23 = sbr.rel (0) target = $region9
    $region8: #{tpu_custom_call.1} parent=1 // pred_region
      %25 = vsyncadd [#allocation6], 0
      %s26 = sshll.u32 %s1, 4
      %s27 = int_to_ptr.hbm [resolvable:$true] %s26
      %s28 = sshll.u32 [#allocation5], 4
      %s29 = int_to_ptr.vmem [resolvable:$true] %s28
      %34 = dma.hbm_to_vmem [thread:$0]  %s27, 10240, %s29, [#allocation6], 128, 128, 8
    $region9: #{tpu_custom_call.1} parent=1 // pred_fallthru
      _
    // Predicated region
    $region10: #{tpu_custom_call.1} parent=1 // pred_check
      _
    $region11: #{tpu_custom_call.1} parent=1 // pred_check_branch
      %36 = sbr.rel (0) target = $region13
    $region12: #{tpu_custom_call.1} parent=1 // pred_region
      _
    $region13: #{tpu_custom_call.1} parent=1 // pred_fallthru
      _
    // Predicated region
    $region14: #{tpu_custom_call.1} parent=1 // pred_check
      _
    $region15: #{tpu_custom_call.1} parent=1 // pred_check_branch
      %38 = sbr.rel (0) target = $region17
    $region16: #{tpu_custom_call.1} parent=1 // pred_region
      %40 = dma.done [#allocation3], 320
    $region17: #{tpu_custom_call.1} parent=1 // pred_fallthru
      _
    // Predicated region
    $region18: #{tpu_custom_call.1} parent=1 // pred_check
      _
    $region19: #{tpu_custom_call.1} parent=1 // pred_check_branch
      %42 = sbr.rel (0) target = $region21
    $region20: #{tpu_custom_call.1} parent=1 // pred_region
      %44 = dma.done [#allocation6], 10240
    $region21: #{tpu_custom_call.1} parent=1 // pred_fallthru
      _
    %v45 = vld [vmem:[#allocation2] sm:$0xff]
    %v46 = vld [vmem:[#allocation2 + $0x8] sm:$0xff]
    %v47 = vld [vmem:[#allocation2 + $0x10] sm:$0xf]
    %v48 = vld [vmem:[#allocation5] sm:$0xff]
    %v49 = vld [vmem:[#allocation5 + $0x8] sm:$0xff]
    %v50 = vld [vmem:[#allocation5 + $0x10] sm:$0xff]
    %v51 = vld [vmem:[#allocation5 + $0x18] sm:$0xff]
    %v52 = vld [vmem:[#allocation5 + $0x20] sm:$0xff]
    %v53 = vld [vmem:[#allocation5 + $0x28] sm:$0xff]
    %v54 = vld [vmem:[#allocation5 + $0x30] sm:$0xff]
    %v55 = vld [vmem:[#allocation5 + $0x38] sm:$0xff]
    %v56 = vld [vmem:[#allocation5 + $0x40] sm:$0xff]
    %v57 = vld [vmem:[#allocation5 + $0x48] sm:$0xff]
    %v58 = vld [vmem:[#allocation5 + $0x50] sm:$0xff]
    %v59 = vld [vmem:[#allocation5 + $0x58] sm:$0xff]
    %v60 = vld [vmem:[#allocation5 + $0x60] sm:$0xff]
    %v61 = vld [vmem:[#allocation5 + $0x68] sm:$0xff]
    %v62 = vld [vmem:[#allocation5 + $0x70] sm:$0xff]
    %v63 = vld [vmem:[#allocation5 + $0x78] sm:$0xff]
    %v64 = vld [vmem:[#allocation5 + $0x80] sm:$0xff]
    %v65 = vld [vmem:[#allocation5 + $0x88] sm:$0xff]
    %v66 = vld [vmem:[#allocation5 + $0x90] sm:$0xff]
    %v67 = vld [vmem:[#allocation5 + $0x98] sm:$0xff]
    %v68 = vld [vmem:[#allocation5 + $0xa0] sm:$0xff]
    %v69 = vld [vmem:[#allocation5 + $0xa8] sm:$0xff]
    %v70 = vld [vmem:[#allocation5 + $0xb0] sm:$0xff]
    %v71 = vld [vmem:[#allocation5 + $0xb8] sm:$0xff]
    %v72 = vld [vmem:[#allocation5 + $0xc0] sm:$0xff]
    %v73 = vld [vmem:[#allocation5 + $0xc8] sm:$0xff]
    %v74 = vld [vmem:[#allocation5 + $0xd0] sm:$0xff]
    %v75 = vld [vmem:[#allocation5 + $0xd8] sm:$0xff]
    %v76 = vld [vmem:[#allocation5 + $0xe0] sm:$0xff]
    %v77 = vld [vmem:[#allocation5 + $0xe8] sm:$0xff]
    %v78 = vld [vmem:[#allocation5 + $0xf0] sm:$0xff]
    %v79 = vld [vmem:[#allocation5 + $0xf8] sm:$0xff]
    %v80 = vld [vmem:[#allocation5 + $0x100] sm:$0xff]
    %v81 = vld [vmem:[#allocation5 + $0x108] sm:$0xff]
    %v82 = vld [vmem:[#allocation5 + $0x110] sm:$0xff]
    %v83 = vld [vmem:[#allocation5 + $0x118] sm:$0xff]
    %v84 = vld [vmem:[#allocation5 + $0x120] sm:$0xff]
    %v85 = vld [vmem:[#allocation5 + $0x128] sm:$0xff]
    %v86 = vld [vmem:[#allocation5 + $0x130] sm:$0xff]
    %v87 = vld [vmem:[#allocation5 + $0x138] sm:$0xff]
    %v88 = vld [vmem:[#allocation5 + $0x140] sm:$0xff]
    %v89 = vld [vmem:[#allocation5 + $0x148] sm:$0xff]
    %v90 = vld [vmem:[#allocation5 + $0x150] sm:$0xff]
    %v91 = vld [vmem:[#allocation5 + $0x158] sm:$0xff]
    %v92 = vld [vmem:[#allocation5 + $0x160] sm:$0xff]
    %v93 = vld [vmem:[#allocation5 + $0x168] sm:$0xff]
    %v94 = vld [vmem:[#allocation5 + $0x170] sm:$0xff]
    %v95 = vld [vmem:[#allocation5 + $0x178] sm:$0xff]
    %v96 = vld [vmem:[#allocation5 + $0x180] sm:$0xff]
    %v97 = vld [vmem:[#allocation5 + $0x188] sm:$0xff]
    %v98 = vld [vmem:[#allocation5 + $0x190] sm:$0xff]
    %v99 = vld [vmem:[#allocation5 + $0x198] sm:$0xff]
    %v100 = vld [vmem:[#allocation5 + $0x1a0] sm:$0xff]
    %v101 = vld [vmem:[#allocation5 + $0x1a8] sm:$0xff]
    %v102 = vld [vmem:[#allocation5 + $0x1b0] sm:$0xff]
    %v103 = vld [vmem:[#allocation5 + $0x1b8] sm:$0xff]
    %v104 = vld [vmem:[#allocation5 + $0x1c0] sm:$0xff]
    %v105 = vld [vmem:[#allocation5 + $0x1c8] sm:$0xff]
    %v106 = vld [vmem:[#allocation5 + $0x1d0] sm:$0xff]
    %v107 = vld [vmem:[#allocation5 + $0x1d8] sm:$0xff]
    %v108 = vld [vmem:[#allocation5 + $0x1e0] sm:$0xff]
    %v109 = vld [vmem:[#allocation5 + $0x1e8] sm:$0xff]
    %v110 = vld [vmem:[#allocation5 + $0x1f0] sm:$0xff]
    %v111 = vld [vmem:[#allocation5 + $0x1f8] sm:$0xff]
    %v112 = vld [vmem:[#allocation5 + $0x200] sm:$0xff]
    %v113 = vld [vmem:[#allocation5 + $0x208] sm:$0xff]
    %v114 = vld [vmem:[#allocation5 + $0x210] sm:$0xff]
    %v115 = vld [vmem:[#allocation5 + $0x218] sm:$0xff]
    %v116 = vld [vmem:[#allocation5 + $0x220] sm:$0xff]
    %v117 = vld [vmem:[#allocation5 + $0x228] sm:$0xff]
    %v118 = vld [vmem:[#allocation5 + $0x230] sm:$0xff]
    %v119 = vld [vmem:[#allocation5 + $0x238] sm:$0xff]
    %v120 = vld [vmem:[#allocation5 + $0x240] sm:$0xff]
    %v121 = vld [vmem:[#allocation5 + $0x248] sm:$0xff]
    %v122 = vld [vmem:[#allocation5 + $0x250] sm:$0xff]
    %v123 = vld [vmem:[#allocation5 + $0x258] sm:$0xff]
    %v124 = vld [vmem:[#allocation5 + $0x260] sm:$0xff]
    %v125 = vld [vmem:[#allocation5 + $0x268] sm:$0xff]
    %v126 = vld [vmem:[#allocation5 + $0x270] sm:$0xff]
    %v127 = vld [vmem:[#allocation5 + $0x278] sm:$0xff]
    %v128 = vld [vmem:[%s2] sm:$0x1]
    %v130 = vperm.slane %v128, 0
    %135 = vst [vmem:[#allocation1] ss:$2 sm:$0xff] %v45
    %s136 = scalar_lea.vmem [#allocation1], 16
    %137 = vst [vmem:[%s136] ss:$2 sm:$0xff] %v46
    %s138 = scalar_lea.vmem [#allocation1], 32
    %139 = vst [vmem:[%s138] ss:$2 sm:$0xff] %v47
    %v140 = vld.sshfl [vmem:[#allocation1] sm:$0xff pattern:$0x75316420]
    %v141 = vld.sshfl [vmem:[#allocation1 + $0x8] sm:$0xff pattern:$0x75316420]
    %v142 = vld.sshfl [vmem:[#allocation1 + $0x10] sm:$0xff pattern:$0x75316420]
    %v143 = vld.sshfl [vmem:[#allocation1 + $0x18] sm:$0xff pattern:$0x75316420]
    %v144 = vld.sshfl [vmem:[#allocation1 + $0x20] sm:$0xff pattern:$0x75316420]
    %150 = vmatpush.msra.mxu0 %v63
    %151 = vmatpush.msra.mxu0 %v62
    %152 = vmatpush.msra.mxu0 %v61
    %153 = vmatpush.msra.mxu0 %v60
    %154 = vmatpush.msra.mxu0 %v59
    %155 = vmatpush.msra.mxu0 %v58
    %156 = vmatpush.msra.mxu0 %v57
    %157 = vmatpush.msra.mxu0 %v56
    %158 = vmatpush.msra.mxu0 %v55
    %159 = vmatpush.msra.mxu0 %v54
    %160 = vmatpush.msra.mxu0 %v53
    %161 = vmatpush.msra.mxu0 %v52
    %162 = vmatpush.msra.mxu0 %v51
    %163 = vmatpush.msra.mxu0 %v50
    %164 = vmatpush.msra.mxu0 %v49
    %165 = vmatpush.msra.mxu0 %v48
    %166 = vmatmul.f32.gmra.mxu0 %v140
    %v167 = vpop.f32.mrf.mxu0
    %v168 = vadd.f32 %v130, %v167
    %169 = vdwg.mxu0
    %170 = vmatpush.msra.mxu0 %v79
    %171 = vmatpush.msra.mxu0 %v78
    %172 = vmatpush.msra.mxu0 %v77
    %173 = vmatpush.msra.mxu0 %v76
    %174 = vmatpush.msra.mxu0 %v75
    %175 = vmatpush.msra.mxu0 %v74
    %176 = vmatpush.msra.mxu0 %v73
    %177 = vmatpush.msra.mxu0 %v72
    %178 = vmatpush.msra.mxu0 %v71
    %179 = vmatpush.msra.mxu0 %v70
    %180 = vmatpush.msra.mxu0 %v69
    %181 = vmatpush.msra.mxu0 %v68
    %182 = vmatpush.msra.mxu0 %v67
    %183 = vmatpush.msra.mxu0 %v66
    %184 = vmatpush.msra.mxu0 %v65
    %185 = vmatpush.msra.mxu0 %v64
    %186 = vmatmul.f32.gmra.mxu0 %v141
    %v187 = vpop.f32.mrf.mxu0
    %v188 = vadd.f32 %v168, %v187
    %189 = vdwg.mxu0
    %190 = vmatpush.msra.mxu0 %v95
    %191 = vmatpush.msra.mxu0 %v94
    %192 = vmatpush.msra.mxu0 %v93
    %193 = vmatpush.msra.mxu0 %v92
    %194 = vmatpush.msra.mxu0 %v91
    %195 = vmatpush.msra.mxu0 %v90
    %196 = vmatpush.msra.mxu0 %v89
    %197 = vmatpush.msra.mxu0 %v88
    %198 = vmatpush.msra.mxu0 %v87
    %199 = vmatpush.msra.mxu0 %v86
    %200 = vmatpush.msra.mxu0 %v85
    %201 = vmatpush.msra.mxu0 %v84
    %202 = vmatpush.msra.mxu0 %v83
    %203 = vmatpush.msra.mxu0 %v82
    %204 = vmatpush.msra.mxu0 %v81
    %205 = vmatpush.msra.mxu0 %v80
    %206 = vmatmul.f32.gmra.mxu0 %v142
    %v207 = vpop.f32.mrf.mxu0
    %v208 = vadd.f32 %v188, %v207
    %209 = vdwg.mxu0
    %210 = vmatpush.msra.mxu0 %v111
    %211 = vmatpush.msra.mxu0 %v110
    %212 = vmatpush.msra.mxu0 %v109
    %213 = vmatpush.msra.mxu0 %v108
    %214 = vmatpush.msra.mxu0 %v107
    %215 = vmatpush.msra.mxu0 %v106
    %216 = vmatpush.msra.mxu0 %v105
    %217 = vmatpush.msra.mxu0 %v104
    %218 = vmatpush.msra.mxu0 %v103
    %219 = vmatpush.msra.mxu0 %v102
    %220 = vmatpush.msra.mxu0 %v101
    %221 = vmatpush.msra.mxu0 %v100
    %222 = vmatpush.msra.mxu0 %v99
    %223 = vmatpush.msra.mxu0 %v98
    %224 = vmatpush.msra.mxu0 %v97
    %225 = vmatpush.msra.mxu0 %v96
    %226 = vmatmul.f32.gmra.mxu0 %v143
    %v227 = vpop.f32.mrf.mxu0
    %v228 = vadd.f32 %v208, %v227
    %229 = vdwg.mxu0
    %230 = vmatpush.msra.mxu0 %v127
    %231 = vmatpush.msra.mxu0 %v126
    %232 = vmatpush.msra.mxu0 %v125
    %233 = vmatpush.msra.mxu0 %v124
    %234 = vmatpush.msra.mxu0 %v123
    %235 = vmatpush.msra.mxu0 %v122
    %236 = vmatpush.msra.mxu0 %v121
    %237 = vmatpush.msra.mxu0 %v120
    %238 = vmatpush.msra.mxu0 %v119
    %239 = vmatpush.msra.mxu0 %v118
    %240 = vmatpush.msra.mxu0 %v117
    %241 = vmatpush.msra.mxu0 %v116
    %242 = vmatpush.msra.mxu0 %v115
    %243 = vmatpush.msra.mxu0 %v114
    %244 = vmatpush.msra.mxu0 %v113
    %245 = vmatpush.msra.mxu0 %v112
    %246 = vmatmul.f32.gmra.mxu0 %v144
    %v247 = vpop.f32.mrf.mxu0
    %v248 = vadd.f32 %v228, %v247
    %249 = vdwg.mxu0
    %v250 = vsub.f32 0.0, %v248
    %v251 = vmul.f32 %v250, 1.442695
    %v252 = vpow.pop %v251
    %v253 = vadd.f32 %v252, 1.0
    %v254 = vrcp.pop %v253
    %v255 = vmul.f32 %v253, %v254
    %v256 = vsub.f32 1.0, %v255
    %v257 = vmul.f32 %v254, %v256
    %v258 = vadd.f32 %v254, %v257
    %vm259 = vweird.f32 %v253
    %vm260 = vweird.f32 %v254
    %vm261 = vmor %vm259, %vm260
    %v262 = vsel %vm261, %v254, %v258
    %v263 = vand.u32 2147483647, %v253
    %vm264 = vcmp.eq.f32.partialorder %v263, 8.507059e+37
    %v265 = vand.u32 %v253, 2147483648
    %v266 = vor.u32 1.1754944e-38, %v265
    %v267 = vsel %vm264, %v266, %v262
    %v268 = vlaneseq
    %v269 = vand.u32 %v268, 127
    %vm270 = vcmp.lt.s32.totalorder %v269, 0
    %v271 = vsub.s32 0, %v269
    %v272 = vsel %vm270, %v271, %v269
    %v273 = vshrl.u32 %v272, 1
    %v274 = vand.u32 %v272, 1
    %v275 = vsub.s32 0, %v274
    %v276 = vsel %vm270, %v275, %v274
    %vm277 = vcmp.ne.s32.totalorder %v276, 0
    %vm278 = vcmp.lt.s32.totalorder %v276, 0
    %vm279 = vmand %vm278, %vm277
    %v280 = vadd.s32 %v276, 2
    %v281 = vsel %vm279, %v280, %v276
    %vm282 = vcmp.eq.s32.totalorder %v281, 0
    %v283 = vsub.f32 1.0, %v267
    %v284 = vsel %vm282, %v283, %v267
    %285 = vst [vmem:[#allocation7] sm:$0xf] %v284
    // Predicated region
    $region22: #{tpu_custom_call.1} parent=1 // pred_check
      _
    $region23: #{tpu_custom_call.1} parent=1 // pred_check_branch
      %287 = sbr.rel (0) target = $region25
    $region24: #{tpu_custom_call.1} parent=1 // pred_region
      %289 = vsyncadd [#allocation4], 0
      %s291 = sshll.u32 [#allocation7], 4
      %s292 = int_to_ptr.vmem [resolvable:$true] %s291
      %s293 = sshll.u32 %s3, 4
      %s294 = int_to_ptr.hbm [resolvable:$true] %s293
      %296 = dma.vmem_to_hbm [thread:$0]  %s292, 64, %s294, [#allocation4]
    $region25: #{tpu_custom_call.1} parent=1 // pred_fallthru
      _
    // Predicated region
    $region26: #{tpu_custom_call.1} parent=1 // pred_check
      _
    $region27: #{tpu_custom_call.1} parent=1 // pred_check_branch
      %298 = sbr.rel (0) target = $region29
    $region28: #{tpu_custom_call.1} parent=1 // pred_region
      %300 = dma.done [#allocation4], 64
    $region29: #{tpu_custom_call.1} parent=1 // pred_fallthru
      _
    %301 = vsyncpa [#allocation3], 1
    %302 = vsyncpa [#allocation6], 1
    %303 = vsyncpa [#allocation4], 1

</llo_original>
